<compile_context>
chip_gen: v6e
topology: v6e:2x2x1
jax: 0.10.0
libtpu: 0.0.40
codegen_flags: <defaults>
</compile_context>

<pallas_src>
import functools
import math

import jax
import jax.numpy as jnp
from jax import lax
from jax.experimental import pallas as pl
from jax.experimental.pallas import tpu as pltpu

_LANES = 1024  # lane-dense minor dim (multiple of 128)


def _mal_kernel(noise_ref, pred_ref, out_ref, acc_ref, *,
                n_rows, tile_rows, lanes, acc_rows, blocks_per_part,
                has_partial):
    """grid = (n_parts, blocks_per_part); part axis is 'parallel' (megacore),
    block axis is the sequential reduction axis."""
    c = pl.program_id(0)
    t = pl.program_id(1)
    n_inner = pl.num_programs(1)

    @pl.when(t == 0)
    def _():
        acc_ref[...] = jnp.zeros_like(acc_ref)

    def sq_tile():
        z = (noise_ref[...].astype(jnp.float32)
             - pred_ref[...].astype(jnp.float32))
        return z * z

    def fold(sq):
        if acc_rows == tile_rows:
            return sq
        # Sublane-aligned fold onto the (acc_rows, lanes) accumulator shape:
        # pure elementwise vreg adds (VPU only), no cross-lane work.
        return sq.reshape(tile_rows // acc_rows, acc_rows, lanes).sum(axis=0)

    offset = (c * blocks_per_part + t) * tile_rows

    if not has_partial:
        # Every block is fully in range: no masking anywhere.
        acc_ref[...] += fold(sq_tile())
    else:
        is_full = offset + tile_rows <= n_rows

        @pl.when(is_full)
        def _():
            acc_ref[...] += fold(sq_tile())

        @pl.when(jnp.logical_not(is_full))
        def _():
            # Ragged last block (or an index-clamped, fully out-of-range
            # block): mask rows >= n_rows.  Sublane-only iota keeps the mask
            # cheap; this branch executes on at most a couple of grid steps.
            row = offset + lax.broadcasted_iota(jnp.int32, (tile_rows, 1), 0)
            sq = jnp.where(row < n_rows, sq_tile(), 0.0)
            acc_ref[...] += fold(sq)

    @pl.when(t == n_inner - 1)
    def _():
        # Per-part partial dump; cross-lane reduce + /batch happen in wrapper.
        out_ref[...] = acc_ref[...].reshape(1, acc_rows, lanes)


def _tiling_for_device():
    """Generation-aware (tile_rows, vmem_limit_bytes)."""
    try:
        vmem_bytes = int(getattr(pltpu.get_tpu_info(),
                                 "vmem_capacity_bytes", 0))
    except Exception:
        vmem_bytes = 0
    if vmem_bytes > 64 * 1024 * 1024:
        # v5e / v6e: 128 MiB VMEM -> 16 MiB blocks, 64 MiB resident.
        return 4096, 96 * 1024 * 1024
    # v7x-class (64 MiB VMEM per TC) or unknown: stay conservative.
    return 2048, 48 * 1024 * 1024


def mean_absolute_loss(noise: jax.Array, predicted_noise: jax.Array, *,
                       lanes: int = _LANES, tile_rows: int | None = None,
                       num_partials: int = 2) -> jax.Array:
    assert noise.shape == predicted_noise.shape
    assert lanes % 128 == 0
    batch = noise.shape[0]
    total = math.prod(noise.shape)

    default_tile, vmem_limit = _tiling_for_device()
    if tile_rows is None:
        tile_rows = default_tile

    n_flat = noise.reshape(-1)
    p_flat = predicted_noise.reshape(-1)

    main_len = (total // lanes) * lanes
    tail_len = total - main_len

    # Tiny tail (< lanes elements): plain-JAX reduce, no padded HBM copies.
    if tail_len:
        tn = n_flat[main_len:].astype(jnp.float32)
        tp = p_flat[main_len:].astype(jnp.float32)
        tail_sum = jnp.sum((tn - tp) ** 2)
    else:
        tail_sum = jnp.float32(0.0)

    if main_len == 0:
        return tail_sum / jnp.float32(batch)

    n_rows = main_len // lanes
    if tail_len:
        n2 = n_flat[:main_len].reshape(n_rows, lanes)
        p2 = p_flat[:main_len].reshape(n_rows, lanes)
    else:
        n2 = n_flat.reshape(n_rows, lanes)
        p2 = p_flat.reshape(n_rows, lanes)

    if tile_rows >= n_rows:
        tile_rows = n_rows                      # single block == full extent
    else:
        assert tile_rows % 8 == 0, "tile_rows must be a multiple of 8"

    n_blocks = pl.cdiv(n_rows, tile_rows)       # row-blocks (last may be ragged)
    n_parts = num_partials if n_blocks >= num_partials else 1
    blocks_per_part = pl.cdiv(n_blocks, n_parts)
    has_partial = n_parts * blocks_per_part * tile_rows > n_rows
    clamp_blocks = n_parts * blocks_per_part > n_blocks

    acc_rows = 8 if (tile_rows > 8 and tile_rows % 8 == 0) else tile_rows

    if clamp_blocks:
        def row_map(c, t):
            return (jnp.minimum(c * blocks_per_part + t, n_blocks - 1), 0)
    else:
        def row_map(c, t):
            return (c * blocks_per_part + t, 0)

    kernel = functools.partial(
        _mal_kernel, n_rows=n_rows, tile_rows=tile_rows, lanes=lanes,
        acc_rows=acc_rows, blocks_per_part=blocks_per_part,
        has_partial=has_partial)

    partials = pl.pallas_call(
        kernel,
        out_shape=jax.ShapeDtypeStruct((n_parts, acc_rows, lanes), jnp.float32),
        grid=(n_parts, blocks_per_part),
        in_specs=[pl.BlockSpec((tile_rows, lanes), row_map),
                  pl.BlockSpec((tile_rows, lanes), row_map)],
        out_specs=pl.BlockSpec((1, acc_rows, lanes), lambda c, t: (c, 0, 0)),
        scratch_shapes=[pltpu.VMEM((acc_rows, lanes), jnp.float32)],
        compiler_params=pltpu.CompilerParams(
            dimension_semantics=("parallel", "arbitrary"),
            vmem_limit_bytes=vmem_limit),
    )(n2, p2)

    return (jnp.sum(partials) + tail_sum) / jnp.float32(batch)


def _reference(noise, pred):
    z = (noise - pred).astype(jnp.float32)
    return jnp.mean(jnp.sum((z * jnp.conj(z)).real, axis=(1, 2, 3)))


if __name__ == "__main__":
    key = jax.random.PRNGKey(0)
    k1, k2, k3, k4 = jax.random.split(key, 4)

    # Small shape consistent with the module (batch=2, channels=4, spatial=16).
    B, C, H, W = 2, 4, 16, 16
    noise = jax.random.normal(k1, (B, C, H, W), dtype=jnp.float32)
    pred = jax.random.normal(k2, (B, C, H, W), dtype=jnp.float32)

    loss = jax.block_until_ready(mean_absolute_loss(noise, pred))
    ref = _reference(noise, pred)
    assert jnp.allclose(loss, ref, rtol=1e-5, atol=1e-5), (loss, ref)

    # Exercises multi-block grid, 2-way partial split, ragged last block,
    # index-clamped out-of-range block and the non-divisible tail path.
    B2, C2, H2, W2 = 3, 3, 100, 100
    noise2 = jax.random.normal(k3, (B2, C2, H2, W2), dtype=jnp.float32)
    pred2 = jax.random.normal(k4, (B2, C2, H2, W2), dtype=jnp.float32)

    loss2 = jax.block_until_ready(
        mean_absolute_loss(noise2, pred2, tile_rows=64))
    ref2 = _reference(noise2, pred2)
    assert jnp.allclose(loss2, ref2, rtol=1e-4, atol=1e-3), (loss2, ref2)

    print("KERNEL_OK")
</pallas_src>

<mosaic_0001>
module attributes {stable_mosaic.version = 11 : i64} {
  func.func @_mal_kernel(%arg0: i32, %arg1: i32, %arg2: memref<2x1024xf32, #tpu.memory_space<vmem>>, %arg3: memref<2x1024xf32, #tpu.memory_space<vmem>>, %arg4: memref<1x2x1024xf32, #tpu.memory_space<vmem>>, %arg5: memref<2x1024xf32, #tpu.memory_space<vmem>>) attributes {dimension_semantics = [#tpu.dimension_semantics<parallel>, #tpu.dimension_semantics<arbitrary>], iteration_bounds = array<i64: 1, 1>, scalar_prefetch = 0 : i64, scratch_operands = 1 : i64, tpu.core_type = #tpu.core_type<tc>, window_params = [{transform_indices = @transform_0, window_bounds = array<i64: 2, 1024>}, {transform_indices = @transform_1, window_bounds = array<i64: 2, 1024>}, {transform_indices = @transform_2, window_bounds = array<i64: 1, 2, 1024>}]} {
    %c0_i32 = arith.constant 0 : i32
    %0 = arith.cmpi eq, %arg1, %c0_i32 : i32
    %1 = arith.extui %0 : i1 to i32
    %c0_i32_0 = arith.constant 0 : i32
    %2 = arith.cmpi ne, %1, %c0_i32_0 : i32
    scf.if %2 {
      %cst = arith.constant 0.000000e+00 : f32
      %13 = vector.broadcast %cst : f32 to vector<2x1024xf32>
      %c0_10 = arith.constant 0 : index
      %c0_11 = arith.constant 0 : index
      %14 = vector.load %arg5[%c0_10, %c0_11] : memref<2x1024xf32, #tpu.memory_space<vmem>>, vector<2x1024xf32>
      tpu.vector_store %arg5[%c0_10, %c0_11], %13 {strides = array<i32>} : memref<2x1024xf32, #tpu.memory_space<vmem>>, vector<2x1024xf32>,
    } else {
    }
    %c0 = arith.constant 0 : index
    %c0_1 = arith.constant 0 : index
    %3 = vector.load %arg5[%c0, %c0_1] : memref<2x1024xf32, #tpu.memory_space<vmem>>, vector<2x1024xf32>
    %c0_2 = arith.constant 0 : index
    %c0_3 = arith.constant 0 : index
    %4 = vector.load %arg2[%c0_2, %c0_3] : memref<2x1024xf32, #tpu.memory_space<vmem>>, vector<2x1024xf32>
    %c0_4 = arith.constant 0 : index
    %c0_5 = arith.constant 0 : index
    %5 = vector.load %arg3[%c0_4, %c0_5] : memref<2x1024xf32, #tpu.memory_space<vmem>>, vector<2x1024xf32>
    %6 = arith.subf %4, %5 : vector<2x1024xf32>
    %7 = arith.mulf %6, %6 : vector<2x1024xf32>
    %8 = arith.addf %3, %7 : vector<2x1024xf32>
    %c0_6 = arith.constant 0 : index
    %c0_7 = arith.constant 0 : index
    %9 = vector.load %arg5[%c0_6, %c0_7] : memref<2x1024xf32, #tpu.memory_space<vmem>>, vector<2x1024xf32>
    tpu.vector_store %arg5[%c0_6, %c0_7], %8 {strides = array<i32>} : memref<2x1024xf32, #tpu.memory_space<vmem>>, vector<2x1024xf32>,
    %c0_i32_8 = arith.constant 0 : i32
    %10 = arith.cmpi eq, %arg1, %c0_i32_8 : i32
    %11 = arith.extui %10 : i1 to i32
    %c0_i32_9 = arith.constant 0 : i32
    %12 = arith.cmpi ne, %11, %c0_i32_9 : i32
    scf.if %12 {
      %c0_10 = arith.constant 0 : index
      %c0_11 = arith.constant 0 : index
      %13 = vector.load %arg5[%c0_10, %c0_11] : memref<2x1024xf32, #tpu.memory_space<vmem>>, vector<2x1024xf32>
      %14 = vector.shape_cast %13 : vector<2x1024xf32> to vector<1x2x1024xf32>
      %c0_12 = arith.constant 0 : index
      %c0_13 = arith.constant 0 : index
      %c0_14 = arith.constant 0 : index
      %15 = vector.load %arg4[%c0_12, %c0_13, %c0_14] : memref<1x2x1024xf32, #tpu.memory_space<vmem>>, vector<1x2x1024xf32>
      tpu.vector_store %arg4[%c0_12, %c0_13, %c0_14], %14 {strides = array<i32>} : memref<1x2x1024xf32, #tpu.memory_space<vmem>>, vector<1x2x1024xf32>,
    } else {
    }
    return
  }
  func.func @transform_0(%arg0: i32, %arg1: i32) -> (i32, i32) {
    %c1_i32 = arith.constant 1 : i32
    %0 = arith.muli %arg0, %c1_i32 : i32
    %1 = arith.addi %0, %arg1 : i32
    %c0_i32 = arith.constant 0 : i32
    %c0_i32_0 = arith.constant 0 : i32
    return %1, %c0_i32 : i32, i32
  }
  func.func @transform_1(%arg0: i32, %arg1: i32) -> (i32, i32) {
    %c1_i32 = arith.constant 1 : i32
    %0 = arith.muli %arg0, %c1_i32 : i32
    %1 = arith.addi %0, %arg1 : i32
    %c0_i32 = arith.constant 0 : i32
    %c0_i32_0 = arith.constant 0 : i32
    return %1, %c0_i32 : i32, i32
  }
  func.func @transform_2(%arg0: i32, %arg1: i32) -> (i32, i32, i32) {
    %c0_i32 = arith.constant 0 : i32
    %c0_i32_0 = arith.constant 0 : i32
    %c0_i32_1 = arith.constant 0 : i32
    return %arg0, %c0_i32, %c0_i32_0 : i32, i32, i32
  }
}

</mosaic_0001>

<llo_original>
// kernel: tpu_custom_call.1
$region0: #{tpu_custom_call.1}
  #allocation0 [shape = 'u32[]', space=smem, size = 0x4, offset = 0x4, fixed_abs, tag = 'smem constant byte address 0x4 - core index']
  #allocation1 [shape = 'u32[144,128]{1,0:T(1,128)}', space=vmem, size = 0x12000, scoped, tag = 'internal scratch']
  #allocation2 [shape = 'f32[2,1024]{1,0:T(2,128)}', space=vmem, size = 0x2000, scoped, tag = 'scratch operand']
  %s0 = inlined_call_operand.hbm [shape: f32[2,1024], index: 0, kind: input, shape index: {}]
  %s1 = inlined_call_operand.hbm [shape: f32[2,1024], index: 1, kind: input, shape index: {}]
  %s2 = inlined_call_operand.hbm [shape: f32[1,2,1024], index: 2, kind: output, shape index: {}]
  %s3 = sld [smem:[#allocation0]]
  $region34: #{tpu_custom_call.1} parent=0
    _
  %s5 = ssub.s32 1, %s3
  %s6 = scalar_select 0, %s5, %s3
  $region1: #{tpu_custom_call.1} parent=0
    #allocation3 [shape = 'u8[8192]{0}', space=vmem, size = 0x2000, scoped, tag = 'input window, operand 0, single buffered']
    #allocation4 [shape = 's32[1]{0}', space=sflag, size = 0x4, scoped, tag = 'scoped memory for tpu_custom_call.1']
    #allocation5 [shape = 's32[1]{0}', space=sflag, size = 0x4, scoped, tag = 'scoped memory for tpu_custom_call.1']
    #allocation6 [shape = 'u8[8192]{0}', space=vmem, size = 0x2000, scoped, tag = 'input window, operand 1, single buffered']
    #allocation7 [shape = 's32[1]{0}', space=sflag, size = 0x4, scoped, tag = 'scoped memory for tpu_custom_call.1']
    #allocation8 [shape = 'u8[8192]{0}', space=vmem, size = 0x2000, scoped, tag = 'output window, operand 0, single buffered']
    %7 = vsyncpa [#allocation4], 0
    %8 = vsyncpa [#allocation7], 0
    %9 = vsyncpa [#allocation5], 0
    // Predicated region
    $region2: #{tpu_custom_call.1} parent=1 // pred_check
      _
    $region3: #{tpu_custom_call.1} parent=1 // pred_check_branch
      %11 = sbr.rel (0) target = $region5
    $region4: #{tpu_custom_call.1} parent=1 // pred_region
      %s12 = sadd.s32 0, 0
      %s14 = ssub.s32 256, 256
      %15 = vsyncadd [#allocation4], %s14
      %s16 = smul.addr %s12, 8
      %s17 = smul.addr %s16, 32
      %s18 = scalar_lea.hbm %s0, %s17
      %s20 = sshll.u32 [#allocation3], 4
      %s21 = int_to_ptr.vmem [resolvable:$true] %s20
      %23 = dma.hbm_to_vmem [thread:$0]  %s18, 256, %s21, [#allocation4]
    $region5: #{tpu_custom_call.1} parent=1 // pred_fallthru
      _
    // Predicated region
    $region6: #{tpu_custom_call.1} parent=1 // pred_check
      _
    $region7: #{tpu_custom_call.1} parent=1 // pred_check_branch
      %25 = sbr.rel (0) target = $region9
    $region8: #{tpu_custom_call.1} parent=1 // pred_region
      %s26 = sadd.s32 0, 0
      %s28 = ssub.s32 256, 256
      %29 = vsyncadd [#allocation7], %s28
      %s30 = smul.addr %s26, 8
      %s31 = smul.addr %s30, 32
      %s32 = scalar_lea.hbm %s1, %s31
      %s34 = sshll.u32 [#allocation6], 4
      %s35 = int_to_ptr.vmem [resolvable:$true] %s34
      %37 = dma.hbm_to_vmem [thread:$0]  %s32, 256, %s35, [#allocation7]
    $region9: #{tpu_custom_call.1} parent=1 // pred_fallthru
      _
    // Predicated region
    $region10: #{tpu_custom_call.1} parent=1 // pred_check
      _
    $region11: #{tpu_custom_call.1} parent=1 // pred_check_branch
      %39 = sbr.rel (0) target = $region13
    $region12: #{tpu_custom_call.1} parent=1 // pred_region
      %40 = dma.done [#allocation4], 256
    $region13: #{tpu_custom_call.1} parent=1 // pred_fallthru
      _
    // Predicated region
    $region14: #{tpu_custom_call.1} parent=1 // pred_check
      _
    $region15: #{tpu_custom_call.1} parent=1 // pred_check_branch
      %42 = sbr.rel (0) target = $region17
    $region16: #{tpu_custom_call.1} parent=1 // pred_region
      %43 = dma.done [#allocation7], 256
    $region17: #{tpu_custom_call.1} parent=1 // pred_fallthru
      _
    %s44 = sadd.s32 0, 0
    %s45 = sadd.s32 0, 0
    %p46 = scmp.eq.s32.totalorder 0, 0
    // Predicated region
    $region18: #{tpu_custom_call.1} parent=1 // pred_check
      %p47 = pneg %p46
    $region19: #{tpu_custom_call.1} parent=1 // pred_check_branch
      %49 = sbr.rel (%p47) target = $region21
    $region20: #{tpu_custom_call.1} parent=1 // pred_region
      %50 = vst [vmem:[#allocation2] sm:$0xff] 0.0
      %51 = vst [vmem:[#allocation2 + $0x8] sm:$0xff] 0.0
    $region21: #{tpu_custom_call.1} parent=1 // pred_fallthru
      _
    %v52 = vld [vmem:[#allocation2] sm:$0xff]
    %v53 = vld [vmem:[#allocation2 + $0x8] sm:$0xff]
    %v54 = vld [vmem:[#allocation3] sm:$0xff]
    %v55 = vld [vmem:[#allocation3 + $0x8] sm:$0xff]
    %v56 = vld [vmem:[#allocation6] sm:$0xff]
    %v57 = vld [vmem:[#allocation6 + $0x8] sm:$0xff]
    %v58 = vsub.f32 %v54, %v56
    %v59 = vsub.f32 %v55, %v57
    %v60 = vmul.f32 %v58, %v58
    %v61 = vmul.f32 %v59, %v59
    %v62 = vadd.f32 %v52, %v60
    %v63 = vadd.f32 %v53, %v61
    %64 = vst [vmem:[#allocation2] sm:$0xff] %v62
    %65 = vst [vmem:[#allocation2 + $0x8] sm:$0xff] %v63
    // Predicated region
    $region22: #{tpu_custom_call.1} parent=1 // pred_check
      %p66 = pneg %p46
    $region23: #{tpu_custom_call.1} parent=1 // pred_check_branch
      %68 = sbr.rel (%p66) target = $region25
    $region24: #{tpu_custom_call.1} parent=1 // pred_region
      %v69 = vld [vmem:[#allocation2] sm:$0xff]
      %v70 = vld [vmem:[#allocation2 + $0x8] sm:$0xff]
      %71 = vst [vmem:[#allocation8] sm:$0xff] %v69
      %72 = vst [vmem:[#allocation8 + $0x8] sm:$0xff] %v70
    $region25: #{tpu_custom_call.1} parent=1 // pred_fallthru
      _
    // Predicated region
    $region26: #{tpu_custom_call.1} parent=1 // pred_check
      _
    $region27: #{tpu_custom_call.1} parent=1 // pred_check_branch
      %74 = sbr.rel (0) target = $region29
    $region28: #{tpu_custom_call.1} parent=1 // pred_region
      %s76 = ssub.s32 256, 256
      %77 = vsyncadd [#allocation5], %s76
      %s79 = sshll.u32 [#allocation8], 4
      %s80 = int_to_ptr.vmem [resolvable:$true] %s79
      %82 = dma.vmem_to_hbm [thread:$0]  %s80, 256, %s2, [#allocation5]
    $region29: #{tpu_custom_call.1} parent=1 // pred_fallthru
      _
    // Predicated region
    $region30: #{tpu_custom_call.1} parent=1 // pred_check
      _
    $region31: #{tpu_custom_call.1} parent=1 // pred_check_branch
      %84 = sbr.rel (0) target = $region33
    $region32: #{tpu_custom_call.1} parent=1 // pred_region
      %85 = dma.done [#allocation5], 256
    $region33: #{tpu_custom_call.1} parent=1 // pred_fallthru
      _
    %86 = vsyncpa [#allocation4], 1
    %87 = vsyncpa [#allocation7], 1
    %88 = vsyncpa [#allocation5], 1

</llo_original>
